<compile_context>
chip_gen: v6e
topology: v6e:2x2x1
jax: 0.10.0
libtpu: 0.0.40
codegen_flags: <defaults>
</compile_context>

<pallas_src>
import functools

import jax
import jax.numpy as jnp
from jax.experimental import pallas as pl
from jax.experimental.pallas import tpu as pltpu

# FocalLoss.__init__ defaults
_ALPHA = 0.25
_GAMMA = 2.0           # statically 2 -> squared in-kernel
_EPS = 1e-9
_IGNORE_LABEL = -1.0
_WEIGHT = 1.0          # weight=None -> 1.0
_SCALE = 1.0
# from_logits=False, size_average=True, batch_axis=0

_LANES = 128
_SUBLANES = 8


def _focal_loss_kernel(pred_ref, label_ref, out_ref, lsum_ref, wsum_ref,
                       *, rows_total, tile_rows, mask_tail):
    k = pl.program_id(1)

    @pl.when(k == 0)
    def _init():
        lsum_ref[...] = jnp.zeros_like(lsum_ref)
        wsum_ref[...] = jnp.zeros_like(wsum_ref)

    pred = pred_ref[0].astype(jnp.float32)      # (tile_rows, 128)
    label = label_ref[0].astype(jnp.float32)    # (tile_rows, 128)

    if mask_tail:
        # Ragged tail: rows beyond the real extent R carry unspecified data.
        # Forcing their label to ignore_label makes alpha = 0, pt = 1,
        # log-term = 0 -> exactly 0 loss and 0 valid-count (NaN-safe: all
        # garbage-dependent values are cut by jnp.where / multiplied by 0).
        row = (jax.lax.broadcasted_iota(jnp.int32, label.shape, 0)
               + k * tile_rows)
        label = jnp.where(row < rows_total, label, _IGNORE_LABEL)

    one_hot = label > 0.5
    valid = label != _IGNORE_LABEL              # sample_weight mask
    sw_f = valid.astype(jnp.float32)

    # from_logits=False -> sigmoid (EUP: exp + recip)
    p = jax.nn.sigmoid(pred)

    alpha = jnp.where(one_hot, _ALPHA * sw_f, (1.0 - _ALPHA) * sw_f)
    pt = jnp.where(valid, 1.0 - jnp.abs(label - p), 1.0)
    q = 1.0 - pt
    beta = q * q                                # gamma == 2: VPU square, not pow
    loss = -alpha * beta * jnp.log(jnp.minimum(pt + _EPS, 1.0))   # EUP: log
    # alpha already carries the valid mask and _WEIGHT == 1, so no extra
    # `loss * sample_weight` multiply is needed.

    lsum_ref[...] += jnp.sum(loss, axis=0, keepdims=True)   # (1, 128)
    wsum_ref[...] += jnp.sum(sw_f, axis=0, keepdims=True)   # (1, 128)

    @pl.when(k == pl.num_programs(1) - 1)
    def _finalize():
        total_l = jnp.sum(lsum_ref[...])
        total_w = jnp.sum(wsum_ref[...])
        val = _SCALE * total_l / (total_w + _EPS)
        out_ref[...] = jnp.broadcast_to(val, out_ref.shape).astype(out_ref.dtype)


@functools.partial(jax.jit, static_argnames=("tile_rows",))
def focal_loss(pred, label, tile_rows=2048):
    """pred, label: (B, C, H, W) arrays (NCHW). Returns (B,) f32 loss."""
    B = pred.shape[0]
    N = pred.size // B

    pred2 = pred.reshape(B, N)
    label2 = label.reshape(B, N)

    # Pad only up to the next multiple of 128 lanes (<= 127 elems/sample);
    # padded pixels get ignore_label so they contribute nothing.
    lane_pad = (-N) % _LANES
    if lane_pad:
        pred2 = jnp.pad(pred2, ((0, 0), (0, lane_pad)))
        label2 = jnp.pad(label2, ((0, 0), (0, lane_pad)),
                         constant_values=_IGNORE_LABEL)
    R = (N + lane_pad) // _LANES               # rows of 128 lanes

    tile_rows = max(_SUBLANES, (tile_rows // _SUBLANES) * _SUBLANES)
    if R >= _SUBLANES:
        tr = min(tile_rows, (R // _SUBLANES) * _SUBLANES)  # sublane-aligned
    else:
        tr = R                                  # block == full dim (tiny input)
    K = pl.cdiv(R, tr)
    mask_tail = (R % tr) != 0                   # static: only emit mask if needed

    pred3 = pred2.reshape(B, R, _LANES)
    label3 = label2.reshape(B, R, _LANES)

    kernel = functools.partial(_focal_loss_kernel, rows_total=R,
                               tile_rows=tr, mask_tail=mask_tail)

    out = pl.pallas_call(
        kernel,
        out_shape=jax.ShapeDtypeStruct((B, 1, _LANES), jnp.float32),
        grid_spec=pltpu.PrefetchScalarGridSpec(
            num_scalar_prefetch=0,
            grid=(B, K),
            in_specs=[
                pl.BlockSpec((1, tr, _LANES), lambda b, k: (b, k, 0)),
                pl.BlockSpec((1, tr, _LANES), lambda b, k: (b, k, 0)),
            ],
            out_specs=pl.BlockSpec((1, 1, _LANES), lambda b, k: (b, 0, 0)),
            scratch_shapes=[
                pltpu.VMEM((1, _LANES), jnp.float32),   # loss partial sums
                pltpu.VMEM((1, _LANES), jnp.float32),   # valid-count partials
            ],
        ),
        compiler_params=pltpu.CompilerParams(
            # batch axis can be sharded across TensorCores (v7x megacore);
            # reduction axis carries the resident scratch accumulators.
            dimension_semantics=("parallel", "arbitrary")),
    )(pred3, label3)
    return out[:, 0, 0]


def focal_loss_ref(pred, label):
    """Pure-JAX reference mirroring the PyTorch forward."""
    one_hot = label > 0.5
    sw = label != _IGNORE_LABEL
    sw_f = sw.astype(jnp.float32)
    p = jax.nn.sigmoid(pred)
    alpha = jnp.where(one_hot, _ALPHA * sw_f, (1.0 - _ALPHA) * sw_f)
    pt = jnp.where(sw, 1.0 - jnp.abs(label - p), jnp.ones_like(p))
    beta = (1.0 - pt) ** _GAMMA
    loss = -alpha * beta * jnp.log(jnp.minimum(pt + _EPS, 1.0))
    loss = _WEIGHT * (loss * sw_f)
    red = tuple(range(1, label.ndim))
    tsum = jnp.sum(sw_f, axis=red)
    return _SCALE * jnp.sum(loss, axis=red) / (tsum + _EPS)


def _make_inputs(key, shape):
    k1, k2, k3 = jax.random.split(key, 3)
    pred = jax.random.normal(k1, shape, dtype=jnp.float32)
    label = (jax.random.uniform(k2, shape) > 0.5).astype(jnp.float32)
    ignore_mask = jax.random.uniform(k3, shape) < 0.1
    label = jnp.where(ignore_mask, jnp.float32(_IGNORE_LABEL), label)
    return pred, label


if __name__ == "__main__":
    key = jax.random.PRNGKey(0)
    k_a, k_b = jax.random.split(key)

    # Primary shape from the spec-sized example: exactly divisible case.
    pred, label = _make_inputs(k_a, (2, 4, 16, 16))
    out = focal_loss(pred, label)
    jax.block_until_ready(out)
    ref = focal_loss_ref(pred, label)
    assert out.shape == (2,)
    assert jnp.allclose(out, ref, rtol=1e-5, atol=1e-6), (out, ref)

    # Second shape exercises the in-kernel ragged-tail masking path
    # (N = 5*16*16 = 1280 -> R = 10 rows, tile_rows = 8, K = 2, masked tail).
    pred2, label2 = _make_inputs(k_b, (2, 5, 16, 16))
    out2 = focal_loss(pred2, label2)
    jax.block_until_ready(out2)
    ref2 = focal_loss_ref(pred2, label2)
    assert jnp.allclose(out2, ref2, rtol=1e-5, atol=1e-6), (out2, ref2)

    print("KERNEL_OK")
</pallas_src>

<mosaic_0001>
module attributes {stable_mosaic.version = 11 : i64} {
  func.func @_focal_loss_kernel(%arg0: i32, %arg1: i32, %arg2: memref<1x8x128xf32, #tpu.memory_space<vmem>>, %arg3: memref<1x8x128xf32, #tpu.memory_space<vmem>>, %arg4: memref<1x1x128xf32, #tpu.memory_space<vmem>>, %arg5: memref<1x128xf32, #tpu.memory_space<vmem>>, %arg6: memref<1x128xf32, #tpu.memory_space<vmem>>) attributes {dimension_semantics = [#tpu.dimension_semantics<parallel>, #tpu.dimension_semantics<arbitrary>], iteration_bounds = array<i64: 2, 1>, scalar_prefetch = 0 : i64, scratch_operands = 2 : i64, tpu.core_type = #tpu.core_type<tc>, window_params = [{transform_indices = @transform_0, window_bounds = array<i64: 1, 8, 128>}, {transform_indices = @transform_1, window_bounds = array<i64: 1, 8, 128>}, {transform_indices = @transform_2, window_bounds = array<i64: 1, 1, 128>}]} {
    %c0_i32 = arith.constant 0 : i32
    %0 = arith.cmpi eq, %arg1, %c0_i32 : i32
    %1 = arith.extui %0 : i1 to i32
    %c0_i32_0 = arith.constant 0 : i32
    %2 = arith.cmpi ne, %1, %c0_i32_0 : i32
    scf.if %2 {
      %cst_28 = arith.constant 0.000000e+00 : f32
      %54 = vector.broadcast %cst_28 : f32 to vector<1x128xf32>
      %c0_29 = arith.constant 0 : index
      %c0_30 = arith.constant 0 : index
      %55 = vector.load %arg5[%c0_29, %c0_30] : memref<1x128xf32, #tpu.memory_space<vmem>>, vector<1x128xf32>
      tpu.vector_store %arg5[%c0_29, %c0_30], %54 {strides = array<i32>} : memref<1x128xf32, #tpu.memory_space<vmem>>, vector<1x128xf32>,
      %cst_31 = arith.constant 0.000000e+00 : f32
      %56 = vector.broadcast %cst_31 : f32 to vector<1x128xf32>
      %c0_32 = arith.constant 0 : index
      %c0_33 = arith.constant 0 : index
      %57 = vector.load %arg6[%c0_32, %c0_33] : memref<1x128xf32, #tpu.memory_space<vmem>>, vector<1x128xf32>
      tpu.vector_store %arg6[%c0_32, %c0_33], %56 {strides = array<i32>} : memref<1x128xf32, #tpu.memory_space<vmem>>, vector<1x128xf32>,
    } else {
    }
    %c0 = arith.constant 0 : index
    %c0_1 = arith.constant 0 : index
    %c0_2 = arith.constant 0 : index
    %3 = vector.load %arg2[%c0, %c0_1, %c0_2] : memref<1x8x128xf32, #tpu.memory_space<vmem>>, vector<1x8x128xf32>
    %4 = vector.shape_cast %3 : vector<1x8x128xf32> to vector<8x128xf32>
    %c0_3 = arith.constant 0 : index
    %c0_4 = arith.constant 0 : index
    %c0_5 = arith.constant 0 : index
    %5 = vector.load %arg3[%c0_3, %c0_4, %c0_5] : memref<1x8x128xf32, #tpu.memory_space<vmem>>, vector<1x8x128xf32>
    %6 = vector.shape_cast %5 : vector<1x8x128xf32> to vector<8x128xf32>
    %cst = arith.constant 5.000000e-01 : f32
    %7 = vector.broadcast %cst : f32 to vector<8x128xf32>
    %8 = arith.cmpf ogt, %6, %7 : vector<8x128xf32>
    %cst_6 = arith.constant -1.000000e+00 : f32
    %9 = vector.broadcast %cst_6 : f32 to vector<8x128xf32>
    %10 = arith.cmpf one, %6, %9 : vector<8x128xf32>
    %11 = arith.extui %10 : vector<8x128xi1> to vector<8x128xi32>
    %12 = arith.sitofp %11 : vector<8x128xi32> to vector<8x128xf32>
    %13 = arith.negf %4 : vector<8x128xf32>
    %14 = math.exp %13 : vector<8x128xf32>
    %cst_7 = arith.constant 1.000000e+00 : f32
    %15 = vector.broadcast %cst_7 : f32 to vector<8x128xf32>
    %16 = arith.addf %15, %14 : vector<8x128xf32>
    %17 = arith.divf %15, %16 : vector<8x128xf32>
    %cst_8 = arith.constant 2.500000e-01 : f32
    %18 = vector.broadcast %cst_8 : f32 to vector<8x128xf32>
    %19 = arith.mulf %18, %12 : vector<8x128xf32>
    %cst_9 = arith.constant 7.500000e-01 : f32
    %20 = vector.broadcast %cst_9 : f32 to vector<8x128xf32>
    %21 = arith.mulf %20, %12 : vector<8x128xf32>
    %22 = arith.select %8, %19, %21 : vector<8x128xi1>, vector<8x128xf32>
    %23 = arith.subf %6, %17 : vector<8x128xf32>
    %24 = math.absf %23 : vector<8x128xf32>
    %cst_10 = arith.constant 1.000000e+00 : f32
    %25 = vector.broadcast %cst_10 : f32 to vector<8x128xf32>
    %26 = arith.subf %25, %24 : vector<8x128xf32>
    %cst_11 = arith.constant 1.000000e+00 : f32
    %27 = vector.broadcast %cst_11 : f32 to vector<8x128xf32>
    %28 = arith.select %10, %26, %27 : vector<8x128xi1>, vector<8x128xf32>
    %cst_12 = arith.constant 1.000000e+00 : f32
    %29 = vector.broadcast %cst_12 : f32 to vector<8x128xf32>
    %30 = arith.subf %29, %28 : vector<8x128xf32>
    %31 = arith.mulf %30, %30 : vector<8x128xf32>
    %cst_13 = arith.constant 0.000000e+00 : f32
    %32 = vector.broadcast %cst_13 : f32 to vector<8x128xf32>
    %33 = arith.subf %32, %22 : vector<8x128xf32>
    %34 = arith.mulf %33, %31 : vector<8x128xf32>
    %cst_14 = arith.constant 9.99999971E-10 : f32
    %35 = vector.broadcast %cst_14 : f32 to vector<8x128xf32>
    %36 = arith.addf %28, %35 : vector<8x128xf32>
    %cst_15 = arith.constant 1.000000e+00 : f32
    %37 = vector.broadcast %cst_15 : f32 to vector<8x128xf32>
    %38 = arith.minimumf %36, %37 : vector<8x128xf32>
    %39 = math.log %38 : vector<8x128xf32>
    %40 = arith.mulf %34, %39 : vector<8x128xf32>
    %c0_16 = arith.constant 0 : index
    %c0_17 = arith.constant 0 : index
    %41 = vector.load %arg5[%c0_16, %c0_17] : memref<1x128xf32, #tpu.memory_space<vmem>>, vector<1x128xf32>
    %cst_18 = arith.constant dense<0.000000e+00> : vector<128xf32>
    %42 = vector.multi_reduction <add>, %40, %cst_18 [0] : vector<8x128xf32> to vector<128xf32>
    %43 = vector.shape_cast %42 : vector<128xf32> to vector<1x128xf32>
    %44 = arith.addf %41, %43 : vector<1x128xf32>
    %c0_19 = arith.constant 0 : index
    %c0_20 = arith.constant 0 : index
    %45 = vector.load %arg5[%c0_19, %c0_20] : memref<1x128xf32, #tpu.memory_space<vmem>>, vector<1x128xf32>
    tpu.vector_store %arg5[%c0_19, %c0_20], %44 {strides = array<i32>} : memref<1x128xf32, #tpu.memory_space<vmem>>, vector<1x128xf32>,
    %c0_21 = arith.constant 0 : index
    %c0_22 = arith.constant 0 : index
    %46 = vector.load %arg6[%c0_21, %c0_22] : memref<1x128xf32, #tpu.memory_space<vmem>>, vector<1x128xf32>
    %cst_23 = arith.constant dense<0.000000e+00> : vector<128xf32>
    %47 = vector.multi_reduction <add>, %12, %cst_23 [0] : vector<8x128xf32> to vector<128xf32>
    %48 = vector.shape_cast %47 : vector<128xf32> to vector<1x128xf32>
    %49 = arith.addf %46, %48 : vector<1x128xf32>
    %c0_24 = arith.constant 0 : index
    %c0_25 = arith.constant 0 : index
    %50 = vector.load %arg6[%c0_24, %c0_25] : memref<1x128xf32, #tpu.memory_space<vmem>>, vector<1x128xf32>
    tpu.vector_store %arg6[%c0_24, %c0_25], %49 {strides = array<i32>} : memref<1x128xf32, #tpu.memory_space<vmem>>, vector<1x128xf32>,
    %c0_i32_26 = arith.constant 0 : i32
    %51 = arith.cmpi eq, %arg1, %c0_i32_26 : i32
    %52 = arith.extui %51 : i1 to i32
    %c0_i32_27 = arith.constant 0 : i32
    %53 = arith.cmpi ne, %52, %c0_i32_27 : i32
    scf.if %53 {
      %c0_28 = arith.constant 0 : index
      %c0_29 = arith.constant 0 : index
      %54 = vector.load %arg5[%c0_28, %c0_29] : memref<1x128xf32, #tpu.memory_space<vmem>>, vector<1x128xf32>
      %55 = vector.shape_cast %54 : vector<1x128xf32> to vector<1x1x128xf32>
      %cst_30 = arith.constant dense<0.000000e+00> : vector<1xf32>
      %56 = vector.multi_reduction <add>, %55, %cst_30 [1, 2] : vector<1x1x128xf32> to vector<1xf32>
      %57 = vector.shape_cast %56 : vector<1xf32> to vector<1x1x1xf32>
      %58 = vector.extract %57[0, 0, 0] : f32 from vector<1x1x1xf32>
      %c0_31 = arith.constant 0 : index
      %c0_32 = arith.constant 0 : index
      %59 = vector.load %arg6[%c0_31, %c0_32] : memref<1x128xf32, #tpu.memory_space<vmem>>, vector<1x128xf32>
      %60 = vector.shape_cast %59 : vector<1x128xf32> to vector<1x1x128xf32>
      %cst_33 = arith.constant dense<0.000000e+00> : vector<1xf32>
      %61 = vector.multi_reduction <add>, %60, %cst_33 [1, 2] : vector<1x1x128xf32> to vector<1xf32>
      %62 = vector.shape_cast %61 : vector<1xf32> to vector<1x1x1xf32>
      %63 = vector.extract %62[0, 0, 0] : f32 from vector<1x1x1xf32>
      %cst_34 = arith.constant 1.000000e+00 : f32
      %64 = arith.mulf %cst_34, %58 : f32
      %cst_35 = arith.constant 9.99999971E-10 : f32
      %65 = arith.addf %63, %cst_35 : f32
      %66 = arith.divf %64, %65 : f32
      %67 = vector.broadcast %66 : f32 to vector<1x1x128xf32>
      %c0_36 = arith.constant 0 : index
      %c0_37 = arith.constant 0 : index
      %c0_38 = arith.constant 0 : index
      %68 = vector.load %arg4[%c0_36, %c0_37, %c0_38] : memref<1x1x128xf32, #tpu.memory_space<vmem>>, vector<1x1x128xf32>
      tpu.vector_store %arg4[%c0_36, %c0_37, %c0_38], %67 {strides = array<i32>} : memref<1x1x128xf32, #tpu.memory_space<vmem>>, vector<1x1x128xf32>,
    } else {
    }
    return
  }
  func.func @transform_0(%arg0: i32, %arg1: i32) -> (i32, i32, i32) {
    %c0_i32 = arith.constant 0 : i32
    %c0_i32_0 = arith.constant 0 : i32
    return %arg0, %arg1, %c0_i32 : i32, i32, i32
  }
  func.func @transform_1(%arg0: i32, %arg1: i32) -> (i32, i32, i32) {
    %c0_i32 = arith.constant 0 : i32
    %c0_i32_0 = arith.constant 0 : i32
    return %arg0, %arg1, %c0_i32 : i32, i32, i32
  }
  func.func @transform_2(%arg0: i32, %arg1: i32) -> (i32, i32, i32) {
    %c0_i32 = arith.constant 0 : i32
    %c0_i32_0 = arith.constant 0 : i32
    %c0_i32_1 = arith.constant 0 : i32
    return %arg0, %c0_i32, %c0_i32_0 : i32, i32, i32
  }
}

</mosaic_0001>

<llo_original>
// kernel: focal_loss.1
$region0: #{focal_loss.1}
  #allocation0 [shape = 'u32[]', space=smem, size = 0x4, offset = 0x4, fixed_abs, tag = 'smem constant byte address 0x4 - core index']
  #allocation1 [shape = 'u32[144,128]{1,0:T(1,128)}', space=vmem, size = 0x12000, scoped, tag = 'internal scratch']
  #allocation2 [shape = 'f32[1,128]{1,0:T(1,128)}', space=vmem, size = 0x200, scoped, tag = 'scratch operand']
  #allocation3 [shape = 'f32[1,128]{1,0:T(1,128)}', space=vmem, size = 0x200, scoped, tag = 'scratch operand']
  %s0 = inlined_call_operand.vmem [shape: f32[2,8,128], index: 0, kind: input, shape index: {}]
  %s1 = inlined_call_operand.vmem [shape: f32[2,8,128], index: 1, kind: input, shape index: {}]
  %s2 = inlined_call_operand.vmem [shape: f32[2,1,128], index: 2, kind: output, shape index: {}]
  %s3 = sld [smem:[#allocation0]]
  $region49: #{focal_loss.1} parent=0
    _
  %s5 = ssub.s32 1, %s3
  %s6 = scalar_select 0, %s5, %s3
  loop: start=0, step=1, limit=4
  $region2: #{focal_loss.1} parent=0 // loop_pre_header
    _
  $region3: #{focal_loss.1} parent=0 // loop_header
    %s8 = sphi 0, %s12
    %p9 = scmp.ge.s32.totalorder %s8, 4
    %s15 = sphi 0, %s27
    %s16 = sphi 0, %s23
    %s17 = sphi 0, %s15
    %s18 = sphi 0, %s16
    %s19 = sphi 0, %s17
    %s20 = sphi 0, %s18
    %s32 = sphi 0, %s34
    %s35 = sphi 0, %s32
    %s36 = sphi 0, %s35
    %s52 = sphi 0, %s36
    %s60 = sphi 0, %s62
    %s63 = sphi 0, %s60
    %s64 = sphi 0, %s63
    %s80 = sphi 0, %s64
    %s86 = sphi 0, %s88
    %s89 = sphi 0, %s86
    %s90 = sphi 0, %s89
    %s106 = sphi 0, %s90
  $region4: #{focal_loss.1} parent=0 // loop_header_branch
    %11 = sbr.rel (%p9) target = $region8
  $region5: #{focal_loss.1} parent=0 // loop_body
    %s13 = ssub.s32 %s8, 1
    %s14 = ssub.s32 %s8, 2
    %s21 = sadd.s32 1, %s16
    %p22 = scmp.ge.s32.totalorder %s21, 1
    %s23 = scalar_select %p22, 0, %s21
    %s24 = sadd.s32 1, %s15
    %s25 = scalar_select %p22, %s24, %s15
    %p26 = scmp.ge.s32.totalorder %s25, 2
    %s27 = scalar_select %p26, 0, %s25
    %s28 = ssub.s32 %s15, %s27
    %s29 = ssub.s32 %s16, %s23
    %s30 = sor.u32 %s28, %s29
    %p31 = scmp.eq.s32.totalorder %s30, 0
    %s33 = sadd.s32 %s32, 1
    %s34 = scalar_select %p31, %s32, %s33
    %p37 = pneg %p31
    %p38 = scmp.eq.s32.totalorder %s8, 1
    %p39 = por %p37, %p38
    %p40 = scmp.ne.s32.totalorder %s32, %s35
    %p41 = scmp.eq.s32.totalorder %s8, 0
    %p42 = por %p40, %p41
    %p43 = scmp.ne.s32.totalorder %s32, %s35
    %p44 = scmp.eq.s32.totalorder %s13, 1
    %p45 = por %p43, %p44
    %p46 = scmp.ne.s32.totalorder %s35, %s36
    %p47 = scmp.eq.s32.totalorder %s13, 0
    %p48 = por %p46, %p47
    %p49 = scmp.ne.s32.totalorder %s35, %s36
    %p50 = scmp.eq.s32.totalorder %s14, 1
    %p51 = por %p49, %p50
    %p53 = scmp.ne.s32.totalorder %s36, %s52
    %p54 = scmp.eq.s32.totalorder %s14, 0
    %p55 = por %p53, %p54
    %s56 = ssub.s32 %s15, %s27
    %s57 = ssub.s32 %s16, %s23
    %s58 = sor.u32 %s56, %s57
    %p59 = scmp.eq.s32.totalorder %s58, 0
    %s61 = sadd.s32 %s60, 1
    %s62 = scalar_select %p59, %s60, %s61
    %p65 = pneg %p59
    %p66 = scmp.eq.s32.totalorder %s8, 1
    %p67 = por %p65, %p66
    %p68 = scmp.ne.s32.totalorder %s60, %s63
    %p69 = scmp.eq.s32.totalorder %s8, 0
    %p70 = por %p68, %p69
    %p71 = scmp.ne.s32.totalorder %s60, %s63
    %p72 = scmp.eq.s32.totalorder %s13, 1
    %p73 = por %p71, %p72
    %p74 = scmp.ne.s32.totalorder %s63, %s64
    %p75 = scmp.eq.s32.totalorder %s13, 0
    %p76 = por %p74, %p75
    %p77 = scmp.ne.s32.totalorder %s63, %s64
    %p78 = scmp.eq.s32.totalorder %s14, 1
    %p79 = por %p77, %p78
    %p81 = scmp.ne.s32.totalorder %s64, %s80
    %p82 = scmp.eq.s32.totalorder %s14, 0
    %p83 = por %p81, %p82
    %s84 = ssub.s32 %s15, %s27
    %p85 = scmp.eq.s32.totalorder %s84, 0
    %s87 = sadd.s32 %s86, 1
    %s88 = scalar_select %p85, %s86, %s87
    %p91 = pneg %p85
    %p92 = scmp.eq.s32.totalorder %s8, 1
    %p93 = por %p91, %p92
    %p94 = scmp.ne.s32.totalorder %s86, %s89
    %p95 = scmp.eq.s32.totalorder %s8, 0
    %p96 = por %p94, %p95
    %p97 = scmp.ne.s32.totalorder %s86, %s89
    %p98 = scmp.eq.s32.totalorder %s13, 1
    %p99 = por %p97, %p98
    %p100 = scmp.ne.s32.totalorder %s89, %s90
    %p101 = scmp.eq.s32.totalorder %s13, 0
    %p102 = por %p100, %p101
    %p103 = scmp.ne.s32.totalorder %s89, %s90
    %p104 = scmp.eq.s32.totalorder %s14, 1
    %p105 = por %p103, %p104
    %p107 = scmp.ne.s32.totalorder %s90, %s106
    %p108 = scmp.eq.s32.totalorder %s14, 0
    %p109 = por %p107, %p108
    %p110 = scmp.le.s32.totalorder 1, %s8
    %p111 = scmp.lt.s32.totalorder %s8, 3
    %p112 = pnand %p110, %p111
    %p113 = pneg %p112
    // Predicated region
    $region9: #{focal_loss.1} parent=5 // pred_check
      _
    $region10: #{focal_loss.1} parent=5 // pred_check_branch
      %115 = sbr.rel (%p112) target = $region12
    $region11: #{focal_loss.1} parent=5 // pred_region
      %s116 = ssub.s32 %s8, 1
    $region12: #{focal_loss.1} parent=5 // pred_fallthru
      _
    %p117 = scmp.lt.s32.totalorder %s8, 2
    // Predicated region
    $region13: #{focal_loss.1} parent=5 // pred_check
      %p118 = pneg %p117
    $region14: #{focal_loss.1} parent=5 // pred_check_branch
      %120 = sbr.rel (%p118) target = $region16
    $region15: #{focal_loss.1} parent=5 // pred_region
      // Predicated region
      $region17: #{focal_loss.1} parent=15 // pred_check
        %p121 = pneg %p42
      $region18: #{focal_loss.1} parent=15 // pred_check_branch
        %123 = sbr.rel (%p121) target = $region20
      $region19: #{focal_loss.1} parent=15 // pred_region
        %p124 = scmp.lt.s32.totalorder %s15, 1
        %s125 = scalar_select %p124, %s15, 1
        %p126 = scmp.lt.s32.totalorder %s16, 0
        %s127 = scalar_select %p126, %s16, 0
        %s128 = sadd.s32 %s127, %s125
        %s129 = smul.addr %s128, 8
        %s130 = scalar_lea.vmem %s0, %s129
      $region20: #{focal_loss.1} parent=15 // pred_fallthru
        _
      // Predicated region
      $region21: #{focal_loss.1} parent=15 // pred_check
        %p131 = pneg %p70
      $region22: #{focal_loss.1} parent=15 // pred_check_branch
        %133 = sbr.rel (%p131) target = $region24
      $region23: #{focal_loss.1} parent=15 // pred_region
        %p134 = scmp.lt.s32.totalorder %s15, 1
        %s135 = scalar_select %p134, %s15, 1
        %p136 = scmp.lt.s32.totalorder %s16, 0
        %s137 = scalar_select %p136, %s16, 0
        %s138 = sadd.s32 %s137, %s135
        %s139 = smul.addr %s138, 8
        %s140 = scalar_lea.vmem %s1, %s139
      $region24: #{focal_loss.1} parent=15 // pred_fallthru
        _
    $region16: #{focal_loss.1} parent=5 // pred_fallthru
      _
    %p141 = scmp.le.s32.totalorder 1, %s8
    %p142 = scmp.lt.s32.totalorder %s8, 3
    %p143 = pnand %p141, %p142
    %p144 = pneg %p143
    // Predicated region
    $region25: #{focal_loss.1} parent=5 // pred_check
      _
    $region26: #{focal_loss.1} parent=5 // pred_check_branch
      %146 = sbr.rel (%p143) target = $region28
    $region27: #{focal_loss.1} parent=5 // pred_region
      %s147 = ssub.s32 %s8, 1
      %p148 = scmp.lt.s32.totalorder %s17, 1
      %s149 = scalar_select %p148, %s17, 1
      %p150 = scmp.lt.s32.totalorder %s18, 0
      %s151 = scalar_select %p150, %s18, 0
      %s152 = sadd.s32 %s151, %s149
      %s153 = smul.addr %s152, 8
      %s154 = scalar_lea.vmem %s0, %s153
      %p155 = pneg %p48
      %p156 = pneg %p45
      %p157 = scmp.lt.s32.totalorder %s17, 1
      %s158 = scalar_select %p157, %s17, 1
      %p159 = scmp.lt.s32.totalorder %s18, 0
      %s160 = scalar_select %p159, %s18, 0
      %s161 = sadd.s32 %s160, %s158
      %s162 = smul.addr %s161, 8
      %s163 = scalar_lea.vmem %s1, %s162
      %p164 = pneg %p76
      %p165 = pneg %p73
      %p166 = pneg %p102
      %p167 = pneg %p99
      %p168 = scmp.lt.s32.totalorder %s17, 1
      %s169 = scalar_select %p168, %s17, 1
      %s170 = scalar_lea.vmem %s2, %s169
      %p171 = scmp.lt.s32.totalorder %s17, 1
      %s172 = scalar_select %p171, %s17, 1
      %p173 = scmp.lt.s32.totalorder %s18, 0
      %s174 = scalar_select %p173, %s18, 0
      %s175 = sadd.s32 %s174, %s172
      %s176 = smul.addr %s175, 8
      %s177 = scalar_lea.vmem %s0, %s176
      %p178 = scmp.lt.s32.totalorder %s17, 1
      %s179 = scalar_select %p178, %s17, 1
      %p180 = scmp.lt.s32.totalorder %s18, 0
      %s181 = scalar_select %p180, %s18, 0
      %s182 = sadd.s32 %s181, %s179
      %s183 = smul.addr %s182, 8
      %s184 = scalar_lea.vmem %s1, %s183
      %p185 = scmp.lt.s32.totalorder %s17, 1
      %s186 = scalar_select %p185, %s17, 1
      %s187 = scalar_lea.vmem %s2, %s186
      %p188 = scmp.eq.s32.totalorder %s18, 0
      // Predicated region
      $region29: #{focal_loss.1} parent=27 // pred_check
        %p189 = pneg %p188
      $region30: #{focal_loss.1} parent=27 // pred_check_branch
        %191 = sbr.rel (%p189) target = $region32
      $region31: #{focal_loss.1} parent=27 // pred_region
        %192 = vst [vmem:[#allocation2] sm:$0x1] 0.0
        %193 = vst [vmem:[#allocation3] sm:$0x1] 0.0
      $region32: #{focal_loss.1} parent=27 // pred_fallthru
        _
      %v194 = vld [vmem:[%s177] sm:$0xff]
      %v195 = vld [vmem:[%s184] sm:$0xff]
      %vm196 = vcmp.gt.f32.partialorder %v195, 0.5
      %vm197 = vcmp.ne.f32.partialorder %v195, -1.0
      %v198 = vsel %vm197, 1, 0
      %v199 = vcvt.s32.f32 %v198
      %v200 = vxor.u32 %v194, 2147483648
      %v201 = vmul.f32 %v200, 1.442695
      %v202 = vpow.pop %v201
      %v203 = vadd.f32 %v202, 1.0
      %v204 = vrcp.pop %v203
      %v205 = vmul.f32 1.0, %v204
      %v206 = vmul.f32 %v199, 0.25
      %v207 = vmul.f32 %v199, 0.75
      %v208 = vsel %vm196, %v206, %v207
      %v209 = vsub.f32 %v195, %v205
      %v210 = vand.u32 2147483647, %v209
      %v211 = vsub.f32 1.0, %v210
      %v212 = vsel %vm197, %v211, 1.0
      %v213 = vsub.f32 1.0, %v212
      %v214 = vmul.f32 %v213, %v213
      %v215 = vsub.f32 0.0, %v208
      %v216 = vmul.f32 %v215, %v214
      %v217 = vadd.f32 %v212, 1e-09
      %v218 = vmin.f32 %v217, 1.0
      %v219 = vlog2.pop %v218
      %v220 = vmul.f32 %v219, 0.6931472
      %v221 = vmul.f32 %v216, %v220
      %v222 = vld [vmem:[#allocation2] sm:$0x1]
      %v223 = vrot.slane %v221, 4
      %v224 = vadd.f32 %v221, %v223
      %v225 = vrot.slane %v224, 2
      %v226 = vadd.f32 %v224, %v225
      %v227 = vrot.slane %v226, 1
      %v228 = vadd.f32 %v226, %v227
      %v229 = vadd.f32 %v222, %v228
      %230 = vst [vmem:[#allocation2] sm:$0x1] %v229
      %v231 = vld [vmem:[#allocation3] sm:$0x1]
      %v232 = vrot.slane %v199, 4
      %v233 = vadd.f32 %v199, %v232
      %v234 = vrot.slane %v233, 2
      %v235 = vadd.f32 %v233, %v234
      %v236 = vrot.slane %v235, 1
      %v237 = vadd.f32 %v235, %v236
      %v238 = vadd.f32 %v231, %v237
      %239 = vst [vmem:[#allocation3] sm:$0x1] %v238
      // Predicated region
      $region33: #{focal_loss.1} parent=27 // pred_check
        %p240 = pneg %p188
      $region34: #{focal_loss.1} parent=27 // pred_check_branch
        %242 = sbr.rel (%p240) target = $region36
      $region35: #{focal_loss.1} parent=27 // pred_region
        %v243 = vld [vmem:[#allocation2] sm:$0x1]
        %vm244 = vcmask 1040384
        %v245 = vsel %vm244, %v243, 0.0
        %246 = vadd.xlane.f32.xlu0 %v245
        %v247 = vpop.xlane.xlu0 %246
        %v248 = vrot.slane %v247, 4
        %v249 = vadd.f32 %v247, %v248
        %v250 = vrot.slane %v249, 2
        %v251 = vadd.f32 %v249, %v250
        %v252 = vrot.slane %v251, 1
        %v253 = vadd.f32 %v251, %v252
        %s254 = vtos %v253
        %v255 = vld [vmem:[#allocation3] sm:$0x1]
        %v256 = vsel %vm244, %v255, 0.0
        %257 = vadd.xlane.f32.xlu0 %v256
        %v258 = vpop.xlane.xlu0 %257
        %v259 = vrot.slane %v258, 4
        %v260 = vadd.f32 %v258, %v259
        %v261 = vrot.slane %v260, 2
        %v262 = vadd.f32 %v260, %v261
        %v263 = vrot.slane %v262, 1
        %v264 = vadd.f32 %v262, %v263
        %s265 = vtos %v264
        %s266 = sadd.f32 %s265, 1e-09
        %v267 = vstv %s266
        %v268 = vrcp.pop %v267
        %s269 = vtos %v268
        %s270 = smul.f32 %s254, %s269
        %v271 = vstv %s270
        %272 = vst [vmem:[%s187] sm:$0x1] %v271
      $region36: #{focal_loss.1} parent=27 // pred_fallthru
        _
      %p273 = scmp.lt.s32.totalorder %s17, 1
      %s274 = scalar_select %p273, %s17, 1
      %s275 = scalar_lea.vmem %s2, %s274
      // Predicated region
      $region37: #{focal_loss.1} parent=27 // pred_check
        %p276 = pneg %p99
      $region38: #{focal_loss.1} parent=27 // pred_check_branch
        %278 = sbr.rel (%p276) target = $region40
      $region39: #{focal_loss.1} parent=27 // pred_region
        _
      $region40: #{focal_loss.1} parent=27 // pred_fallthru
        _
    $region28: #{focal_loss.1} parent=5 // pred_fallthru
      _
    %p279 = scmp.le.s32.totalorder 2, %s8
    // Predicated region
    $region41: #{focal_loss.1} parent=5 // pred_check
      %p280 = pneg %p279
    $region42: #{focal_loss.1} parent=5 // pred_check_branch
      %282 = sbr.rel (%p280) target = $region44
    $region43: #{focal_loss.1} parent=5 // pred_region
      %s283 = ssub.s32 %s8, 2
      // Predicated region
      $region45: #{focal_loss.1} parent=43 // pred_check
        %p284 = pneg %p105
      $region46: #{focal_loss.1} parent=43 // pred_check_branch
        %286 = sbr.rel (%p284) target = $region48
      $region47: #{focal_loss.1} parent=43 // pred_region
        %p287 = scmp.lt.s32.totalorder %s19, 1
        %s288 = scalar_select %p287, %s19, 1
        %s289 = scalar_lea.vmem %s2, %s288
      $region48: #{focal_loss.1} parent=43 // pred_fallthru
        _
    $region44: #{focal_loss.1} parent=5 // pred_fallthru
      _
  $region6: #{focal_loss.1} parent=0 // loop_footer
    %s12 = sadd.s32 1, %s8
  $region7: #{focal_loss.1} parent=0 // loop_footer_branch
    %7 = sbr.rel target = $region3
  $region8: #{focal_loss.1} parent=0 // loop_exit
    _

</llo_original>
